<compile_context>
chip_gen: v6e
topology: v6e:2x2x1
jax: 0.10.0
libtpu: 0.0.40
codegen_flags: <defaults>
</compile_context>

<pallas_src>
import jax
import jax.numpy as jnp
from jax.experimental import pallas as pl
from jax.experimental.pallas import tpu as pltpu

BN_EPS = 1e-5
N_FT = 64          # hidden width of the module
N_FT_PAD = 128     # lane-padded hidden width used inside the kernel


def _bn_train_folded(h, gamma, beta):
    """Training-mode BatchNorm1d folded into one per-feature scale/shift.

    scale = gamma * rsqrt(var + eps);  shift = beta - mu * scale
    Batch stats via one pass (sum, sum of squares) in f32.
    Padded features (gamma = beta = 0, column all zeros) map exactly to 0.
    """
    inv_b = jnp.float32(1.0 / h.shape[0])
    s1 = jnp.sum(h, axis=0, keepdims=True)
    s2 = jnp.sum(h * h, axis=0, keepdims=True)
    mu = s1 * inv_b
    var = jnp.maximum(s2 * inv_b - mu * mu, 0.0)
    scale = gamma * jax.lax.rsqrt(var + BN_EPS)
    shift = beta - mu * scale
    return h * scale + shift


def routing_kernel(x_ref,
                   w1_ref, g1_ref, be1_ref,
                   w2_ref, g2_ref, be2_ref,
                   w3_ref, b3_ref,
                   o_ref):
    # Feed the input dtype (f32 or bf16) straight to the MXU; accumulate in f32.
    x = x_ref[...]

    # Linear(n_labels -> n_ft_pad); bias dropped (cancels under training BN).
    h = jnp.dot(x, w1_ref[...], preferred_element_type=jnp.float32)
    h = jnp.maximum(_bn_train_folded(h, g1_ref[...], be1_ref[...]), 0.0)

    # Linear(n_ft_pad -> n_labels); bias dropped (cancels under training BN).
    h = jnp.dot(h, w2_ref[...], preferred_element_type=jnp.float32)
    h = jnp.maximum(_bn_train_folded(h, g2_ref[...], be2_ref[...]), 0.0)

    # Linear(n_labels -> 1) + Sigmoid as VPU multiply + XLU lane reduction.
    z = jnp.sum(h * w3_ref[...], axis=-1, keepdims=True) + b3_ref[...]
    o_ref[...] = jax.nn.sigmoid(z).astype(o_ref.dtype)


def pack_params(p, n_ft_pad=N_FT_PAD):
    """Transform module parameters into the kernel-facing layout.

    * zero-pad the hidden width to n_ft_pad (gamma/beta pads = 0 keep the
      padded lanes exactly 0 through BN+ReLU; zero w2 rows make them inert),
    * drop b1/b2 (exact under training-mode BN),
    * reshape w3 to a (1, n_labels) row for the lane-reduction final layer.
    """
    n_ft = p["w1"].shape[1]
    pad = n_ft_pad - n_ft
    w1 = jnp.pad(p["w1"], ((0, 0), (0, pad)))
    g1 = jnp.pad(p["g1"], ((0, 0), (0, pad)))
    be1 = jnp.pad(p["be1"], ((0, 0), (0, pad)))
    w2 = jnp.pad(p["w2"], ((0, pad), (0, 0)))
    w3 = p["w3"].reshape(1, -1)
    b3 = p["b3"].reshape(1, 1)
    return (w1, g1, be1, w2, p["g2"], p["be2"], w3, b3)


def routing_b1_forward(t_logits, params):
    """Single-shot kernel: the whole MLP + batch fits comfortably in VMEM."""
    B = t_logits.shape[0]
    args = (t_logits,) + pack_params(params)
    vmem_spec = pl.BlockSpec(memory_space=pltpu.MemorySpace.VMEM)
    return pl.pallas_call(
        routing_kernel,
        out_shape=jax.ShapeDtypeStruct((B, 1), jnp.float32),
        in_specs=[vmem_spec] * len(args),
        out_specs=vmem_spec,
    )(*args)


def init_params(key, n_labels, n_ft=N_FT):
    ks = jax.random.split(key, 8)
    # Deterministic synthetic init (not a checkpoint load).
    def lin(k, fan_in, fan_out):
        bound = 1.0 / jnp.sqrt(fan_in)
        kw, kb = jax.random.split(k)
        w = jax.random.uniform(kw, (fan_in, fan_out), jnp.float32, -bound, bound)
        b = jax.random.uniform(kb, (1, fan_out), jnp.float32, -bound, bound)
        return w, b

    w1, b1 = lin(ks[0], n_labels, n_ft)
    w2, b2 = lin(ks[1], n_ft, n_labels)
    w3, b3 = lin(ks[2], n_labels, 1)
    # BatchNorm affine params (randomized slightly to exercise the code path).
    g1 = 1.0 + 0.1 * jax.random.normal(ks[3], (1, n_ft), jnp.float32)
    be1 = 0.1 * jax.random.normal(ks[4], (1, n_ft), jnp.float32)
    g2 = 1.0 + 0.1 * jax.random.normal(ks[5], (1, n_labels), jnp.float32)
    be2 = 0.1 * jax.random.normal(ks[6], (1, n_labels), jnp.float32)
    return dict(w1=w1, b1=b1, g1=g1, be1=be1,
                w2=w2, b2=b2, g2=g2, be2=be2,
                w3=w3, b3=b3)


def _batchnorm_ref(h, gamma, beta):
    # Canonical two-pass training-mode BatchNorm (reference only).
    mu = jnp.mean(h, axis=0, keepdims=True)
    var = jnp.mean((h - mu) ** 2, axis=0, keepdims=True)
    return (h - mu) * jax.lax.rsqrt(var + BN_EPS) * gamma + beta


def routing_b1_reference(x, p):
    # Canonical (unpadded, with biases) module math for validation.
    h = x @ p["w1"] + p["b1"]
    h = jnp.maximum(_batchnorm_ref(h, p["g1"], p["be1"]), 0.0)
    h = h @ p["w2"] + p["b2"]
    h = jnp.maximum(_batchnorm_ref(h, p["g2"], p["be2"]), 0.0)
    z = h @ p["w3"] + p["b3"]
    return jax.nn.sigmoid(z)


if __name__ == "__main__":
    # Small shapes consistent with the module: batch=64, n_labels=128, n_ft=64.
    B, N_LABELS = 64, 128
    key = jax.random.PRNGKey(0)
    k_x, k_p = jax.random.split(key)
    t_logits = jax.random.normal(k_x, (B, N_LABELS), jnp.float32)
    params = init_params(k_p, N_LABELS)

    fwd = jax.jit(routing_b1_forward)
    gate = jax.block_until_ready(fwd(t_logits, params))

    ref = routing_b1_reference(t_logits, params)
    assert gate.shape == (B, 1)
    assert jnp.allclose(gate, ref, atol=2e-5, rtol=2e-5)
    print("KERNEL_OK")
</pallas_src>

<mosaic_0001>
module attributes {stable_mosaic.version = 11 : i64} {
  func.func @routing_kernel(%arg0: memref<64x128xf32, #tpu.memory_space<vmem>>, %arg1: memref<128x128xf32, #tpu.memory_space<vmem>>, %arg2: memref<1x128xf32, #tpu.memory_space<vmem>>, %arg3: memref<1x128xf32, #tpu.memory_space<vmem>>, %arg4: memref<128x128xf32, #tpu.memory_space<vmem>>, %arg5: memref<1x128xf32, #tpu.memory_space<vmem>>, %arg6: memref<1x128xf32, #tpu.memory_space<vmem>>, %arg7: memref<1x128xf32, #tpu.memory_space<vmem>>, %arg8: memref<1x1xf32, #tpu.memory_space<vmem>>, %arg9: memref<64x1xf32, #tpu.memory_space<vmem>>) attributes {dimension_semantics = [], scalar_prefetch = 0 : i64, scratch_operands = 0 : i64, tpu.core_type = #tpu.core_type<tc>} {
    %c0 = arith.constant 0 : index
    %c0_0 = arith.constant 0 : index
    %0 = vector.load %arg0[%c0, %c0_0] : memref<64x128xf32, #tpu.memory_space<vmem>>, vector<64x128xf32>
    %c0_1 = arith.constant 0 : index
    %c0_2 = arith.constant 0 : index
    %1 = vector.load %arg1[%c0_1, %c0_2] : memref<128x128xf32, #tpu.memory_space<vmem>>, vector<128x128xf32>
    %cst = arith.constant dense<0.000000e+00> : vector<64x128xf32>
    %2 = tpu.matmul %0, %1, %cst {dimension_numbers = #tpu.dot_dimension_numbers<[1], [0], [0], [1], [0, 0, 1, 1], [], []>} : vector<64x128xf32>, vector<128x128xf32>, vector<64x128xf32> -> vector<64x128xf32>
    %c0_3 = arith.constant 0 : index
    %c0_4 = arith.constant 0 : index
    %3 = vector.load %arg2[%c0_3, %c0_4] : memref<1x128xf32, #tpu.memory_space<vmem>>, vector<1x128xf32>
    %c0_5 = arith.constant 0 : index
    %c0_6 = arith.constant 0 : index
    %4 = vector.load %arg3[%c0_5, %c0_6] : memref<1x128xf32, #tpu.memory_space<vmem>>, vector<1x128xf32>
    %cst_7 = arith.constant dense<0.000000e+00> : vector<128xf32>
    %5 = vector.multi_reduction <add>, %2, %cst_7 [0] : vector<64x128xf32> to vector<128xf32>
    %6 = vector.shape_cast %5 : vector<128xf32> to vector<1x128xf32>
    %7 = arith.mulf %2, %2 : vector<64x128xf32>
    %cst_8 = arith.constant dense<0.000000e+00> : vector<128xf32>
    %8 = vector.multi_reduction <add>, %7, %cst_8 [0] : vector<64x128xf32> to vector<128xf32>
    %9 = vector.shape_cast %8 : vector<128xf32> to vector<1x128xf32>
    %cst_9 = arith.constant 1.562500e-02 : f32
    %10 = vector.broadcast %cst_9 : f32 to vector<1x128xf32>
    %11 = arith.mulf %6, %10 : vector<1x128xf32>
    %cst_10 = arith.constant 1.562500e-02 : f32
    %12 = vector.broadcast %cst_10 : f32 to vector<1x128xf32>
    %13 = arith.mulf %9, %12 : vector<1x128xf32>
    %14 = arith.mulf %11, %11 : vector<1x128xf32>
    %15 = arith.subf %13, %14 : vector<1x128xf32>
    %cst_11 = arith.constant 0.000000e+00 : f32
    %16 = vector.broadcast %cst_11 : f32 to vector<1x128xf32>
    %17 = arith.maximumf %15, %16 : vector<1x128xf32>
    %cst_12 = arith.constant 9.99999974E-6 : f32
    %18 = vector.broadcast %cst_12 : f32 to vector<1x128xf32>
    %19 = arith.addf %17, %18 : vector<1x128xf32>
    %20 = math.rsqrt %19 : vector<1x128xf32>
    %21 = arith.mulf %3, %20 : vector<1x128xf32>
    %22 = arith.mulf %11, %21 : vector<1x128xf32>
    %23 = arith.subf %4, %22 : vector<1x128xf32>
    %24 = vector.broadcast %21 : vector<1x128xf32> to vector<64x128xf32>
    %25 = arith.mulf %2, %24 : vector<64x128xf32>
    %26 = vector.broadcast %23 : vector<1x128xf32> to vector<64x128xf32>
    %27 = arith.addf %25, %26 : vector<64x128xf32>
    %cst_13 = arith.constant 0.000000e+00 : f32
    %28 = vector.broadcast %cst_13 : f32 to vector<64x128xf32>
    %29 = arith.maximumf %27, %28 : vector<64x128xf32>
    %c0_14 = arith.constant 0 : index
    %c0_15 = arith.constant 0 : index
    %30 = vector.load %arg4[%c0_14, %c0_15] : memref<128x128xf32, #tpu.memory_space<vmem>>, vector<128x128xf32>
    %cst_16 = arith.constant dense<0.000000e+00> : vector<64x128xf32>
    %31 = tpu.matmul %29, %30, %cst_16 {dimension_numbers = #tpu.dot_dimension_numbers<[1], [0], [0], [1], [0, 0, 1, 1], [], []>} : vector<64x128xf32>, vector<128x128xf32>, vector<64x128xf32> -> vector<64x128xf32>
    %c0_17 = arith.constant 0 : index
    %c0_18 = arith.constant 0 : index
    %32 = vector.load %arg5[%c0_17, %c0_18] : memref<1x128xf32, #tpu.memory_space<vmem>>, vector<1x128xf32>
    %c0_19 = arith.constant 0 : index
    %c0_20 = arith.constant 0 : index
    %33 = vector.load %arg6[%c0_19, %c0_20] : memref<1x128xf32, #tpu.memory_space<vmem>>, vector<1x128xf32>
    %cst_21 = arith.constant dense<0.000000e+00> : vector<128xf32>
    %34 = vector.multi_reduction <add>, %31, %cst_21 [0] : vector<64x128xf32> to vector<128xf32>
    %35 = vector.shape_cast %34 : vector<128xf32> to vector<1x128xf32>
    %36 = arith.mulf %31, %31 : vector<64x128xf32>
    %cst_22 = arith.constant dense<0.000000e+00> : vector<128xf32>
    %37 = vector.multi_reduction <add>, %36, %cst_22 [0] : vector<64x128xf32> to vector<128xf32>
    %38 = vector.shape_cast %37 : vector<128xf32> to vector<1x128xf32>
    %cst_23 = arith.constant 1.562500e-02 : f32
    %39 = vector.broadcast %cst_23 : f32 to vector<1x128xf32>
    %40 = arith.mulf %35, %39 : vector<1x128xf32>
    %cst_24 = arith.constant 1.562500e-02 : f32
    %41 = vector.broadcast %cst_24 : f32 to vector<1x128xf32>
    %42 = arith.mulf %38, %41 : vector<1x128xf32>
    %43 = arith.mulf %40, %40 : vector<1x128xf32>
    %44 = arith.subf %42, %43 : vector<1x128xf32>
    %cst_25 = arith.constant 0.000000e+00 : f32
    %45 = vector.broadcast %cst_25 : f32 to vector<1x128xf32>
    %46 = arith.maximumf %44, %45 : vector<1x128xf32>
    %cst_26 = arith.constant 9.99999974E-6 : f32
    %47 = vector.broadcast %cst_26 : f32 to vector<1x128xf32>
    %48 = arith.addf %46, %47 : vector<1x128xf32>
    %49 = math.rsqrt %48 : vector<1x128xf32>
    %50 = arith.mulf %32, %49 : vector<1x128xf32>
    %51 = arith.mulf %40, %50 : vector<1x128xf32>
    %52 = arith.subf %33, %51 : vector<1x128xf32>
    %53 = vector.broadcast %50 : vector<1x128xf32> to vector<64x128xf32>
    %54 = arith.mulf %31, %53 : vector<64x128xf32>
    %55 = vector.broadcast %52 : vector<1x128xf32> to vector<64x128xf32>
    %56 = arith.addf %54, %55 : vector<64x128xf32>
    %cst_27 = arith.constant 0.000000e+00 : f32
    %57 = vector.broadcast %cst_27 : f32 to vector<64x128xf32>
    %58 = arith.maximumf %56, %57 : vector<64x128xf32>
    %c0_28 = arith.constant 0 : index
    %c0_29 = arith.constant 0 : index
    %59 = vector.load %arg7[%c0_28, %c0_29] : memref<1x128xf32, #tpu.memory_space<vmem>>, vector<1x128xf32>
    %60 = vector.broadcast %59 : vector<1x128xf32> to vector<64x128xf32>
    %61 = arith.mulf %58, %60 : vector<64x128xf32>
    %cst_30 = arith.constant dense<0.000000e+00> : vector<64xf32>
    %62 = vector.multi_reduction <add>, %61, %cst_30 [1] : vector<64x128xf32> to vector<64xf32>
    %63 = vector.shape_cast %62 : vector<64xf32> to vector<64x1xf32>
    %c0_31 = arith.constant 0 : index
    %c0_32 = arith.constant 0 : index
    %64 = vector.load %arg8[%c0_31, %c0_32] : memref<1x1xf32, #tpu.memory_space<vmem>>, vector<1x1xf32>
    %65 = vector.broadcast %64 : vector<1x1xf32> to vector<64x1xf32>
    %66 = arith.addf %63, %65 : vector<64x1xf32>
    %67 = arith.negf %66 : vector<64x1xf32>
    %68 = math.exp %67 : vector<64x1xf32>
    %cst_33 = arith.constant 1.000000e+00 : f32
    %69 = vector.broadcast %cst_33 : f32 to vector<64x1xf32>
    %70 = arith.addf %69, %68 : vector<64x1xf32>
    %71 = arith.divf %69, %70 : vector<64x1xf32>
    %c0_34 = arith.constant 0 : index
    %c0_35 = arith.constant 0 : index
    %72 = vector.load %arg9[%c0_34, %c0_35] : memref<64x1xf32, #tpu.memory_space<vmem>>, vector<64x1xf32>
    tpu.vector_store %arg9[%c0_34, %c0_35], %71 {strides = array<i32>} : memref<64x1xf32, #tpu.memory_space<vmem>>, vector<64x1xf32>,
    return
  }
}

</mosaic_0001>

<llo_original>
// kernel: routing_b1_forward.1
$region0: #{routing_b1_forward.1}
  #allocation0 [shape = 'u32[]', space=smem, size = 0x4, offset = 0x4, fixed_abs, tag = 'smem constant byte address 0x4 - core index']
  #allocation1 [shape = 'u32[144,128]{1,0:T(1,128)}', space=vmem, size = 0x12000, scoped, tag = 'internal scratch']
  #allocation2 [shape = 'f32[1,1]{1,0:T(1,128)S(1)}', space=vmem, size = 0x200, scoped, tag = 'scoped memory for routing_b1_forward.1']
  %s0 = inlined_call_operand.vmem [shape: f32[64,128], index: 0, kind: input, shape index: {}]
  %s1 = inlined_call_operand.vmem [shape: f32[128,128], index: 1, kind: input, shape index: {}]
  %s2 = inlined_call_operand.vmem [shape: f32[1,128], index: 2, kind: input, shape index: {}]
  %s3 = inlined_call_operand.vmem [shape: f32[1,128], index: 3, kind: input, shape index: {}]
  %s4 = inlined_call_operand.vmem [shape: f32[128,128], index: 4, kind: input, shape index: {}]
  %s5 = inlined_call_operand.vmem [shape: f32[1,128], index: 5, kind: input, shape index: {}]
  %s6 = inlined_call_operand.vmem [shape: f32[1,128], index: 6, kind: input, shape index: {}]
  %s7 = inlined_call_operand.vmem [shape: f32[1,128], index: 7, kind: input, shape index: {}]
  %s8 = inlined_call_operand.<no memory space> [shape: f32[1,1], index: 8, kind: input, shape index: {}]
  %s9 = inlined_call_operand.vmem [shape: f32[64,1], index: 9, kind: output, shape index: {}]
  %s10 = sld [smem:[#allocation0]]
  $region46: #{routing_b1_forward.1} parent=0
    _
  %s12 = ssub.s32 1, %s10
  %s13 = scalar_select 0, %s12, %s10
  %v14 = vstv %s8
  %15 = vst [vmem:[#allocation2] sm:$0x1] %v14
  // Predicated region
  $region2: #{routing_b1_forward.1} parent=0 // pred_check
    _
  $region3: #{routing_b1_forward.1} parent=0 // pred_check_branch
    %17 = sbr.rel (0) target = $region5
  $region4: #{routing_b1_forward.1} parent=0 // pred_region
    _
  $region5: #{routing_b1_forward.1} parent=0 // pred_fallthru
    _
  // Predicated region
  $region6: #{routing_b1_forward.1} parent=0 // pred_check
    _
  $region7: #{routing_b1_forward.1} parent=0 // pred_check_branch
    %19 = sbr.rel (0) target = $region9
  $region8: #{routing_b1_forward.1} parent=0 // pred_region
    _
  $region9: #{routing_b1_forward.1} parent=0 // pred_fallthru
    _
  // Predicated region
  $region10: #{routing_b1_forward.1} parent=0 // pred_check
    _
  $region11: #{routing_b1_forward.1} parent=0 // pred_check_branch
    %21 = sbr.rel (0) target = $region13
  $region12: #{routing_b1_forward.1} parent=0 // pred_region
    _
  $region13: #{routing_b1_forward.1} parent=0 // pred_fallthru
    _
  // Predicated region
  $region14: #{routing_b1_forward.1} parent=0 // pred_check
    _
  $region15: #{routing_b1_forward.1} parent=0 // pred_check_branch
    %23 = sbr.rel (0) target = $region17
  $region16: #{routing_b1_forward.1} parent=0 // pred_region
    _
  $region17: #{routing_b1_forward.1} parent=0 // pred_fallthru
    _
  // Predicated region
  $region18: #{routing_b1_forward.1} parent=0 // pred_check
    _
  $region19: #{routing_b1_forward.1} parent=0 // pred_check_branch
    %25 = sbr.rel (0) target = $region21
  $region20: #{routing_b1_forward.1} parent=0 // pred_region
    _
  $region21: #{routing_b1_forward.1} parent=0 // pred_fallthru
    _
  // Predicated region
  $region22: #{routing_b1_forward.1} parent=0 // pred_check
    _
  $region23: #{routing_b1_forward.1} parent=0 // pred_check_branch
    %27 = sbr.rel (0) target = $region25
  $region24: #{routing_b1_forward.1} parent=0 // pred_region
    _
  $region25: #{routing_b1_forward.1} parent=0 // pred_fallthru
    _
  // Predicated region
  $region26: #{routing_b1_forward.1} parent=0 // pred_check
    _
  $region27: #{routing_b1_forward.1} parent=0 // pred_check_branch
    %29 = sbr.rel (0) target = $region29
  $region28: #{routing_b1_forward.1} parent=0 // pred_region
    _
  $region29: #{routing_b1_forward.1} parent=0 // pred_fallthru
    _
  // Predicated region
  $region30: #{routing_b1_forward.1} parent=0 // pred_check
    _
  $region31: #{routing_b1_forward.1} parent=0 // pred_check_branch
    %31 = sbr.rel (0) target = $region33
  $region32: #{routing_b1_forward.1} parent=0 // pred_region
    _
  $region33: #{routing_b1_forward.1} parent=0 // pred_fallthru
    _
  // Predicated region
  $region34: #{routing_b1_forward.1} parent=0 // pred_check
    _
  $region35: #{routing_b1_forward.1} parent=0 // pred_check_branch
    %33 = sbr.rel (0) target = $region37
  $region36: #{routing_b1_forward.1} parent=0 // pred_region
    _
  $region37: #{routing_b1_forward.1} parent=0 // pred_fallthru
    _
  %v34 = vld [vmem:[%s0] sm:$0xff]
  %v35 = vld [vmem:[%s0 + $0x8] sm:$0xff]
  %v36 = vld [vmem:[%s0 + $0x10] sm:$0xff]
  %v37 = vld [vmem:[%s0 + $0x18] sm:$0xff]
  %v38 = vld [vmem:[%s0 + $0x20] sm:$0xff]
  %v39 = vld [vmem:[%s0 + $0x28] sm:$0xff]
  %v40 = vld [vmem:[%s0 + $0x30] sm:$0xff]
  %v41 = vld [vmem:[%s0 + $0x38] sm:$0xff]
  %v42 = vld [vmem:[%s1] sm:$0xff]
  %v43 = vld [vmem:[%s1 + $0x8] sm:$0xff]
  %v44 = vld [vmem:[%s1 + $0x10] sm:$0xff]
  %v45 = vld [vmem:[%s1 + $0x18] sm:$0xff]
  %v46 = vld [vmem:[%s1 + $0x20] sm:$0xff]
  %v47 = vld [vmem:[%s1 + $0x28] sm:$0xff]
  %v48 = vld [vmem:[%s1 + $0x30] sm:$0xff]
  %v49 = vld [vmem:[%s1 + $0x38] sm:$0xff]
  %v50 = vld [vmem:[%s1 + $0x40] sm:$0xff]
  %v51 = vld [vmem:[%s1 + $0x48] sm:$0xff]
  %v52 = vld [vmem:[%s1 + $0x50] sm:$0xff]
  %v53 = vld [vmem:[%s1 + $0x58] sm:$0xff]
  %v54 = vld [vmem:[%s1 + $0x60] sm:$0xff]
  %v55 = vld [vmem:[%s1 + $0x68] sm:$0xff]
  %v56 = vld [vmem:[%s1 + $0x70] sm:$0xff]
  %v57 = vld [vmem:[%s1 + $0x78] sm:$0xff]
  %58 = vmatprep.subr.mxu0 0.0
  %59 = vmatpush1.msra.mxu0 %v57
  %60 = vmatprep.subr.mxu0 0.0
  %61 = vmatpush1.msra.mxu0 %v56
  %62 = vmatprep.subr.mxu0 0.0
  %63 = vmatpush1.msra.mxu0 %v55
  %64 = vmatprep.subr.mxu0 0.0
  %65 = vmatpush1.msra.mxu0 %v54
  %66 = vmatprep.subr.mxu0 0.0
  %67 = vmatpush1.msra.mxu0 %v53
  %68 = vmatprep.subr.mxu0 0.0
  %69 = vmatpush1.msra.mxu0 %v52
  %70 = vmatprep.subr.mxu0 0.0
  %71 = vmatpush1.msra.mxu0 %v51
  %72 = vmatprep.subr.mxu0 0.0
  %73 = vmatpush1.msra.mxu0 %v50
  %74 = vmatprep.subr.mxu0 0.0
  %75 = vmatpush1.msra.mxu0 %v49
  %76 = vmatprep.subr.mxu0 0.0
  %77 = vmatpush1.msra.mxu0 %v48
  %78 = vmatprep.subr.mxu0 0.0
  %79 = vmatpush1.msra.mxu0 %v47
  %80 = vmatprep.subr.mxu0 0.0
  %81 = vmatpush1.msra.mxu0 %v46
  %82 = vmatprep.subr.mxu0 0.0
  %83 = vmatpush1.msra.mxu0 %v45
  %84 = vmatprep.subr.mxu0 0.0
  %85 = vmatpush1.msra.mxu0 %v44
  %86 = vmatprep.subr.mxu0 0.0
  %87 = vmatpush1.msra.mxu0 %v43
  %88 = vmatprep.subr.mxu0 0.0
  %89 = vmatpush1.msra.mxu0 %v42
  %90 = vmatprep.subr.mxu0 0.0
  %91 = vmatpush2.msra.mxu0 0.0
  %92 = vmatprep.subr.mxu0 0.0
  %93 = vmatpush2.msra.mxu0 0.0
  %94 = vmatprep.subr.mxu0 0.0
  %95 = vmatpush2.msra.mxu0 0.0
  %96 = vmatprep.subr.mxu0 0.0
  %97 = vmatpush2.msra.mxu0 0.0
  %98 = vmatprep.subr.mxu0 0.0
  %99 = vmatpush2.msra.mxu0 0.0
  %100 = vmatprep.subr.mxu0 0.0
  %101 = vmatpush2.msra.mxu0 0.0
  %102 = vmatprep.subr.mxu0 0.0
  %103 = vmatpush2.msra.mxu0 0.0
  %104 = vmatprep.subr.mxu0 0.0
  %105 = vmatpush2.msra.mxu0 0.0
  %106 = vmatprep.subr.mxu0 0.0
  %107 = vmatpush2.msra.mxu0 0.0
  %108 = vmatprep.subr.mxu0 0.0
  %109 = vmatpush2.msra.mxu0 0.0
  %110 = vmatprep.subr.mxu0 0.0
  %111 = vmatpush2.msra.mxu0 0.0
  %112 = vmatprep.subr.mxu0 0.0
  %113 = vmatpush2.msra.mxu0 0.0
  %114 = vmatprep.subr.mxu0 0.0
  %115 = vmatpush2.msra.mxu0 0.0
  %116 = vmatprep.subr.mxu0 0.0
  %117 = vmatpush2.msra.mxu0 0.0
  %118 = vmatprep.subr.mxu0 0.0
  %119 = vmatpush2.msra.mxu0 0.0
  %120 = vmatprep.subr.mxu0 0.0
  %121 = vmatpush2.msra.mxu0 0.0
  %122 = vmatprep.mubr.f32.mxu0 0.0
  %123 = vmatmul.mubr.f32.gmra.mxu0 %v34
  %v124 = vpop.f32.mrf.mxu0
  %v125 = vadd.f32 0.0, %v124
  %v126 = vpop.f32.mrf.mxu0
  %127 = vmatprep.mubr.f32.mxu0 0.0
  %128 = vmatmul.mubr.f32.gmra.mxu0 %v35
  %v129 = vpop.f32.mrf.mxu0
  %v130 = vadd.f32 0.0, %v129
  %v131 = vpop.f32.mrf.mxu0
  %132 = vmatprep.mubr.f32.mxu0 0.0
  %133 = vmatmul.mubr.f32.gmra.mxu0 %v36
  %v134 = vpop.f32.mrf.mxu0
  %v135 = vadd.f32 0.0, %v134
  %v136 = vpop.f32.mrf.mxu0
  %137 = vmatprep.mubr.f32.mxu0 0.0
  %138 = vmatmul.mubr.f32.gmra.mxu0 %v37
  %v139 = vpop.f32.mrf.mxu0
  %v140 = vadd.f32 0.0, %v139
  %v141 = vpop.f32.mrf.mxu0
  %142 = vmatprep.mubr.f32.mxu0 0.0
  %143 = vmatmul.mubr.f32.gmra.mxu0 %v38
  %v144 = vpop.f32.mrf.mxu0
  %v145 = vadd.f32 0.0, %v144
  %v146 = vpop.f32.mrf.mxu0
  %147 = vmatprep.mubr.f32.mxu0 0.0
  %148 = vmatmul.mubr.f32.gmra.mxu0 %v39
  %v149 = vpop.f32.mrf.mxu0
  %v150 = vadd.f32 0.0, %v149
  %v151 = vpop.f32.mrf.mxu0
  %152 = vmatprep.mubr.f32.mxu0 0.0
  %153 = vmatmul.mubr.f32.gmra.mxu0 %v40
  %v154 = vpop.f32.mrf.mxu0
  %v155 = vadd.f32 0.0, %v154
  %v156 = vpop.f32.mrf.mxu0
  %157 = vmatprep.mubr.f32.mxu0 0.0
  %158 = vmatmul.mubr.f32.gmra.mxu0 %v41
  %v159 = vpop.f32.mrf.mxu0
  %v160 = vadd.f32 0.0, %v159
  %v161 = vpop.f32.mrf.mxu0
  %162 = vdwg.mxu0
  %v163 = vld [vmem:[%s2] sm:$0x1]
  %v164 = vld [vmem:[%s3] sm:$0x1]
  %v165 = vadd.f32 %v125, %v130
  %v166 = vadd.f32 %v165, %v135
  %v167 = vadd.f32 %v166, %v140
  %v168 = vadd.f32 %v167, %v145
  %v169 = vadd.f32 %v168, %v150
  %v170 = vadd.f32 %v169, %v155
  %v171 = vadd.f32 %v170, %v160
  %v172 = vrot.slane %v171, 4
  %v173 = vadd.f32 %v171, %v172
  %v174 = vrot.slane %v173, 2
  %v175 = vadd.f32 %v173, %v174
  %v176 = vrot.slane %v175, 1
  %v177 = vadd.f32 %v175, %v176
  %v178 = vmul.f32 %v125, %v125
  %v179 = vmul.f32 %v130, %v130
  %v180 = vmul.f32 %v135, %v135
  %v181 = vmul.f32 %v140, %v140
  %v182 = vmul.f32 %v145, %v145
  %v183 = vmul.f32 %v150, %v150
  %v184 = vmul.f32 %v155, %v155
  %v185 = vmul.f32 %v160, %v160
  %v186 = vadd.f32 %v178, %v179
  %v187 = vadd.f32 %v186, %v180
  %v188 = vadd.f32 %v187, %v181
  %v189 = vadd.f32 %v188, %v182
  %v190 = vadd.f32 %v189, %v183
  %v191 = vadd.f32 %v190, %v184
  %v192 = vadd.f32 %v191, %v185
  %v193 = vrot.slane %v192, 4
  %v194 = vadd.f32 %v192, %v193
  %v195 = vrot.slane %v194, 2
  %v196 = vadd.f32 %v194, %v195
  %v197 = vrot.slane %v196, 1
  %v198 = vadd.f32 %v196, %v197
  %v199 = vmul.f32 %v177, 0.015625
  %v200 = vmul.f32 %v198, 0.015625
  %v201 = vmul.f32 %v199, %v199
  %v202 = vsub.f32 %v200, %v201
  %v203 = vmax.f32 %v202, 0.0
  %v204 = vadd.f32 %v203, 1e-05
  %v205 = vrsqrt.pop %v204
  %v206 = vmul.f32 %v163, %v205
  %v207 = vmul.f32 %v199, %v206
  %v208 = vsub.f32 %v164, %v207
  %v210 = vlaneseq
  %v211 = vshrl.u32 %v210, 7
  %v212 = vsub.s32 0, %v211
  %v213 = vrot.slane %v206, %v212
  %v215 = vmul.f32 %v125, %v213
  %v216 = vmul.f32 %v130, %v213
  %v217 = vmul.f32 %v135, %v213
  %v218 = vmul.f32 %v140, %v213
  %v219 = vmul.f32 %v145, %v213
  %v220 = vmul.f32 %v150, %v213
  %v221 = vmul.f32 %v155, %v213
  %v222 = vmul.f32 %v160, %v213
  %v224 = vlaneseq
  %v225 = vshrl.u32 %v224, 7
  %v226 = vsub.s32 0, %v225
  %v227 = vrot.slane %v208, %v226
  %v229 = vadd.f32 %v215, %v227
  %v230 = vadd.f32 %v216, %v227
  %v231 = vadd.f32 %v217, %v227
  %v232 = vadd.f32 %v218, %v227
  %v233 = vadd.f32 %v219, %v227
  %v234 = vadd.f32 %v220, %v227
  %v235 = vadd.f32 %v221, %v227
  %v236 = vadd.f32 %v222, %v227
  %v237 = vmax.f32 %v229, 0.0
  %v238 = vmax.f32 %v230, 0.0
  %v239 = vmax.f32 %v231, 0.0
  %v240 = vmax.f32 %v232, 0.0
  %v241 = vmax.f32 %v233, 0.0
  %v242 = vmax.f32 %v234, 0.0
  %v243 = vmax.f32 %v235, 0.0
  %v244 = vmax.f32 %v236, 0.0
  %v245 = vld [vmem:[%s4] sm:$0xff]
  %v246 = vld [vmem:[%s4 + $0x8] sm:$0xff]
  %v247 = vld [vmem:[%s4 + $0x10] sm:$0xff]
  %v248 = vld [vmem:[%s4 + $0x18] sm:$0xff]
  %v249 = vld [vmem:[%s4 + $0x20] sm:$0xff]
  %v250 = vld [vmem:[%s4 + $0x28] sm:$0xff]
  %v251 = vld [vmem:[%s4 + $0x30] sm:$0xff]
  %v252 = vld [vmem:[%s4 + $0x38] sm:$0xff]
  %v253 = vld [vmem:[%s4 + $0x40] sm:$0xff]
  %v254 = vld [vmem:[%s4 + $0x48] sm:$0xff]
  %v255 = vld [vmem:[%s4 + $0x50] sm:$0xff]
  %v256 = vld [vmem:[%s4 + $0x58] sm:$0xff]
  %v257 = vld [vmem:[%s4 + $0x60] sm:$0xff]
  %v258 = vld [vmem:[%s4 + $0x68] sm:$0xff]
  %v259 = vld [vmem:[%s4 + $0x70] sm:$0xff]
  %v260 = vld [vmem:[%s4 + $0x78] sm:$0xff]
  %261 = vmatprep.subr.mxu0 0.0
  %262 = vmatpush1.msra.mxu0 %v260
  %263 = vmatprep.subr.mxu0 0.0
  %264 = vmatpush1.msra.mxu0 %v259
  %265 = vmatprep.subr.mxu0 0.0
  %266 = vmatpush1.msra.mxu0 %v258
  %267 = vmatprep.subr.mxu0 0.0
  %268 = vmatpush1.msra.mxu0 %v257
  %269 = vmatprep.subr.mxu0 0.0
  %270 = vmatpush1.msra.mxu0 %v256
  %271 = vmatprep.subr.mxu0 0.0
  %272 = vmatpush1.msra.mxu0 %v255
  %273 = vmatprep.subr.mxu0 0.0
  %274 = vmatpush1.msra.mxu0 %v254
  %275 = vmatprep.subr.mxu0 0.0
  %276 = vmatpush1.msra.mxu0 %v253
  %277 = vmatprep.subr.mxu0 0.0
  %278 = vmatpush1.msra.mxu0 %v252
  %279 = vmatprep.subr.mxu0 0.0
  %280 = vmatpush1.msra.mxu0 %v251
  %281 = vmatprep.subr.mxu0 0.0
  %282 = vmatpush1.msra.mxu0 %v250
  %283 = vmatprep.subr.mxu0 0.0
  %284 = vmatpush1.msra.mxu0 %v249
  %285 = vmatprep.subr.mxu0 0.0
  %286 = vmatpush1.msra.mxu0 %v248
  %287 = vmatprep.subr.mxu0 0.0
  %288 = vmatpush1.msra.mxu0 %v247
  %289 = vmatprep.subr.mxu0 0.0
  %290 = vmatpush1.msra.mxu0 %v246
  %291 = vmatprep.subr.mxu0 0.0
  %292 = vmatpush1.msra.mxu0 %v245
  %293 = vmatprep.subr.mxu0 0.0
  %294 = vmatpush2.msra.mxu0 0.0
  %295 = vmatprep.subr.mxu0 0.0
  %296 = vmatpush2.msra.mxu0 0.0
  %297 = vmatprep.subr.mxu0 0.0
  %298 = vmatpush2.msra.mxu0 0.0
  %299 = vmatprep.subr.mxu0 0.0
  %300 = vmatpush2.msra.mxu0 0.0
  %301 = vmatprep.subr.mxu0 0.0
  %302 = vmatpush2.msra.mxu0 0.0
  %303 = vmatprep.subr.mxu0 0.0
  %304 = vmatpush2.msra.mxu0 0.0
  %305 = vmatprep.subr.mxu0 0.0
  %306 = vmatpush2.msra.mxu0 0.0
  %307 = vmatprep.subr.mxu0 0.0
  %308 = vmatpush2.msra.mxu0 0.0
  %309 = vmatprep.subr.mxu0 0.0
  %310 = vmatpush2.msra.mxu0 0.0
  %311 = vmatprep.subr.mxu0 0.0
  %312 = vmatpush2.msra.mxu0 0.0
  %313 = vmatprep.subr.mxu0 0.0
  %314 = vmatpush2.msra.mxu0 0.0
  %315 = vmatprep.subr.mxu0 0.0
  %316 = vmatpush2.msra.mxu0 0.0
  %317 = vmatprep.subr.mxu0 0.0
  %318 = vmatpush2.msra.mxu0 0.0
  %319 = vmatprep.subr.mxu0 0.0
  %320 = vmatpush2.msra.mxu0 0.0
  %321 = vmatprep.subr.mxu0 0.0
  %322 = vmatpush2.msra.mxu0 0.0
  %323 = vmatprep.subr.mxu0 0.0
  %324 = vmatpush2.msra.mxu0 0.0
  %325 = vmatprep.mubr.f32.mxu0 0.0
  %326 = vmatmul.mubr.f32.gmra.mxu0 %v237
  %v327 = vpop.f32.mrf.mxu0
  %v328 = vadd.f32 0.0, %v327
  %v329 = vpop.f32.mrf.mxu0
  %330 = vmatprep.mubr.f32.mxu0 0.0
  %331 = vmatmul.mubr.f32.gmra.mxu0 %v238
  %v332 = vpop.f32.mrf.mxu0
  %v333 = vadd.f32 0.0, %v332
  %v334 = vpop.f32.mrf.mxu0
  %335 = vmatprep.mubr.f32.mxu0 0.0
  %336 = vmatmul.mubr.f32.gmra.mxu0 %v239
  %v337 = vpop.f32.mrf.mxu0
  %v338 = vadd.f32 0.0, %v337
  %v339 = vpop.f32.mrf.mxu0
  %340 = vmatprep.mubr.f32.mxu0 0.0
  %341 = vmatmul.mubr.f32.gmra.mxu0 %v240
  %v342 = vpop.f32.mrf.mxu0
  %v343 = vadd.f32 0.0, %v342
  %v344 = vpop.f32.mrf.mxu0
  %345 = vmatprep.mubr.f32.mxu0 0.0
  %346 = vmatmul.mubr.f32.gmra.mxu0 %v241
  %v347 = vpop.f32.mrf.mxu0
  %v348 = vadd.f32 0.0, %v347
  %v349 = vpop.f32.mrf.mxu0
  %350 = vmatprep.mubr.f32.mxu0 0.0
  %351 = vmatmul.mubr.f32.gmra.mxu0 %v242
  %v352 = vpop.f32.mrf.mxu0
  %v353 = vadd.f32 0.0, %v352
  %v354 = vpop.f32.mrf.mxu0
  %355 = vmatprep.mubr.f32.mxu0 0.0
  %356 = vmatmul.mubr.f32.gmra.mxu0 %v243
  %v357 = vpop.f32.mrf.mxu0
  %v358 = vadd.f32 0.0, %v357
  %v359 = vpop.f32.mrf.mxu0
  %360 = vmatprep.mubr.f32.mxu0 0.0
  %361 = vmatmul.mubr.f32.gmra.mxu0 %v244
  %v362 = vpop.f32.mrf.mxu0
  %v363 = vadd.f32 0.0, %v362
  %v364 = vpop.f32.mrf.mxu0
  %365 = vdwg.mxu0
  %v366 = vld [vmem:[%s5] sm:$0x1]
  %v367 = vld [vmem:[%s6] sm:$0x1]
  %v368 = vadd.f32 %v328, %v333
  %v369 = vadd.f32 %v368, %v338
  %v370 = vadd.f32 %v369, %v343
  %v371 = vadd.f32 %v370, %v348
  %v372 = vadd.f32 %v371, %v353
  %v373 = vadd.f32 %v372, %v358
  %v374 = vadd.f32 %v373, %v363
  %v375 = vrot.slane %v374, 4
  %v376 = vadd.f32 %v374, %v375
  %v377 = vrot.slane %v376, 2
  %v378 = vadd.f32 %v376, %v377
  %v379 = vrot.slane %v378, 1
  %v380 = vadd.f32 %v378, %v379
  %v381 = vmul.f32 %v328, %v328
  %v382 = vmul.f32 %v333, %v333
  %v383 = vmul.f32 %v338, %v338
  %v384 = vmul.f32 %v343, %v343
  %v385 = vmul.f32 %v348, %v348
  %v386 = vmul.f32 %v353, %v353
  %v387 = vmul.f32 %v358, %v358
  %v388 = vmul.f32 %v363, %v363
  %v389 = vadd.f32 %v381, %v382
  %v390 = vadd.f32 %v389, %v383
  %v391 = vadd.f32 %v390, %v384
  %v392 = vadd.f32 %v391, %v385
  %v393 = vadd.f32 %v392, %v386
  %v394 = vadd.f32 %v393, %v387
  %v395 = vadd.f32 %v394, %v388
  %v396 = vrot.slane %v395, 4
  %v397 = vadd.f32 %v395, %v396
  %v398 = vrot.slane %v397, 2
  %v399 = vadd.f32 %v397, %v398
  %v400 = vrot.slane %v399, 1
  %v401 = vadd.f32 %v399, %v400
  %v402 = vmul.f32 %v380, 0.015625
  %v403 = vmul.f32 %v401, 0.015625
  %v404 = vmul.f32 %v402, %v402
  %v405 = vsub.f32 %v403, %v404
  %v406 = vmax.f32 %v405, 0.0
  %v407 = vadd.f32 %v406, 1e-05
  %v408 = vrsqrt.pop %v407
  %v409 = vmul.f32 %v366, %v408
  %v410 = vmul.f32 %v402, %v409
  %v411 = vsub.f32 %v367, %v410
  %v413 = vlaneseq
  %v414 = vshrl.u32 %v413, 7
  %v415 = vsub.s32 0, %v414
  %v416 = vrot.slane %v409, %v415
  %v418 = vmul.f32 %v328, %v416
  %v419 = vmul.f32 %v333, %v416
  %v420 = vmul.f32 %v338, %v416
  %v421 = vmul.f32 %v343, %v416
  %v422 = vmul.f32 %v348, %v416
  %v423 = vmul.f32 %v353, %v416
  %v424 = vmul.f32 %v358, %v416
  %v425 = vmul.f32 %v363, %v416
  %v427 = vlaneseq
  %v428 = vshrl.u32 %v427, 7
  %v429 = vsub.s32 0, %v428
  %v430 = vrot.slane %v411, %v429
  %v432 = vadd.f32 %v418, %v430
  %v433 = vadd.f32 %v419, %v430
  %v434 = vadd.f32 %v420, %v430
  %v435 = vadd.f32 %v421, %v430
  %v436 = vadd.f32 %v422, %v430
  %v437 = vadd.f32 %v423, %v430
  %v438 = vadd.f32 %v424, %v430
  %v439 = vadd.f32 %v425, %v430
  %v440 = vmax.f32 %v432, 0.0
  %v441 = vmax.f32 %v433, 0.0
  %v442 = vmax.f32 %v434, 0.0
  %v443 = vmax.f32 %v435, 0.0
  %v444 = vmax.f32 %v436, 0.0
  %v445 = vmax.f32 %v437, 0.0
  %v446 = vmax.f32 %v438, 0.0
  %v447 = vmax.f32 %v439, 0.0
  %v448 = vld [vmem:[%s7] sm:$0x1]
  %v450 = vlaneseq
  %v451 = vshrl.u32 %v450, 7
  %v452 = vsub.s32 0, %v451
  %v453 = vrot.slane %v448, %v452
  %v455 = vmul.f32 %v440, %v453
  %v456 = vmul.f32 %v441, %v453
  %v457 = vmul.f32 %v442, %v453
  %v458 = vmul.f32 %v443, %v453
  %v459 = vmul.f32 %v444, %v453
  %v460 = vmul.f32 %v445, %v453
  %v461 = vmul.f32 %v446, %v453
  %v462 = vmul.f32 %v447, %v453
  %463 = vadd.xlane.f32.xlu0 %v455
  %v464 = vpop.xlane.xlu0 %463
  %465 = vadd.xlane.f32.xlu0 %v456
  %v466 = vpop.xlane.xlu0 %465
  %467 = vadd.xlane.f32.xlu0 %v457
  %v468 = vpop.xlane.xlu0 %467
  %469 = vadd.xlane.f32.xlu0 %v458
  %v470 = vpop.xlane.xlu0 %469
  %471 = vadd.xlane.f32.xlu0 %v459
  %v472 = vpop.xlane.xlu0 %471
  %473 = vadd.xlane.f32.xlu0 %v460
  %v474 = vpop.xlane.xlu0 %473
  %475 = vadd.xlane.f32.xlu0 %v461
  %v476 = vpop.xlane.xlu0 %475
  %477 = vadd.xlane.f32.xlu0 %v462
  %v478 = vpop.xlane.xlu0 %477
  %v479 = vld [vmem:[#allocation2] sm:$0x1]
  %v481 = vlaneseq
  %v482 = vshrl.u32 %v481, 7
  %v483 = vsub.s32 0, %v482
  %v484 = vrot.slane %v479, %v483
  %v486 = vadd.f32 %v464, %v484
  %v487 = vadd.f32 %v466, %v484
  %v488 = vadd.f32 %v468, %v484
  %v489 = vadd.f32 %v470, %v484
  %v490 = vadd.f32 %v472, %v484
  %v491 = vadd.f32 %v474, %v484
  %v492 = vadd.f32 %v476, %v484
  %v493 = vadd.f32 %v478, %v484
  %v494 = vxor.u32 %v486, 2147483648
  %v495 = vxor.u32 %v487, 2147483648
  %v496 = vxor.u32 %v488, 2147483648
  %v497 = vxor.u32 %v489, 2147483648
  %v498 = vxor.u32 %v490, 2147483648
  %v499 = vxor.u32 %v491, 2147483648
  %v500 = vxor.u32 %v492, 2147483648
  %v501 = vxor.u32 %v493, 2147483648
  %v502 = vmul.f32 %v494, 1.442695
  %v503 = vpow.pop %v502
  %v504 = vmul.f32 %v495, 1.442695
  %v505 = vpow.pop %v504
  %v506 = vmul.f32 %v496, 1.442695
  %v507 = vpow.pop %v506
  %v508 = vmul.f32 %v497, 1.442695
  %v509 = vpow.pop %v508
  %v510 = vmul.f32 %v498, 1.442695
  %v511 = vpow.pop %v510
  %v512 = vmul.f32 %v499, 1.442695
  %v513 = vpow.pop %v512
  %v514 = vmul.f32 %v500, 1.442695
  %v515 = vpow.pop %v514
  %v516 = vmul.f32 %v501, 1.442695
  %v517 = vpow.pop %v516
  %v518 = vadd.f32 %v503, 1.0
  %v519 = vadd.f32 %v505, 1.0
  %v520 = vadd.f32 %v507, 1.0
  %v521 = vadd.f32 %v509, 1.0
  %v522 = vadd.f32 %v511, 1.0
  %v523 = vadd.f32 %v513, 1.0
  %v524 = vadd.f32 %v515, 1.0
  %v525 = vadd.f32 %v517, 1.0
  %v526 = vrcp.pop %v518
  %v527 = vmul.f32 1.0, %v526
  %v528 = vrcp.pop %v519
  %v529 = vmul.f32 1.0, %v528
  %v530 = vrcp.pop %v520
  %v531 = vmul.f32 1.0, %v530
  %v532 = vrcp.pop %v521
  %v533 = vmul.f32 1.0, %v532
  %v534 = vrcp.pop %v522
  %v535 = vmul.f32 1.0, %v534
  %v536 = vrcp.pop %v523
  %v537 = vmul.f32 1.0, %v536
  %v538 = vrcp.pop %v524
  %v539 = vmul.f32 1.0, %v538
  %v540 = vrcp.pop %v525
  %v541 = vmul.f32 1.0, %v540
  %vm542 = vcmask 7168
  %543 = vst.msk [vmem:[%s9] sm:$0xff] %vm542, %v527
  %544 = vst.msk [vmem:[%s9 + $0x8] sm:$0xff] %vm542, %v529
  %545 = vst.msk [vmem:[%s9 + $0x10] sm:$0xff] %vm542, %v531
  %546 = vst.msk [vmem:[%s9 + $0x18] sm:$0xff] %vm542, %v533
  %547 = vst.msk [vmem:[%s9 + $0x20] sm:$0xff] %vm542, %v535
  %548 = vst.msk [vmem:[%s9 + $0x28] sm:$0xff] %vm542, %v537
  %549 = vst.msk [vmem:[%s9 + $0x30] sm:$0xff] %vm542, %v539
  %550 = vst.msk [vmem:[%s9 + $0x38] sm:$0xff] %vm542, %v541
  // Predicated region
  $region38: #{routing_b1_forward.1} parent=0 // pred_check
    _
  $region39: #{routing_b1_forward.1} parent=0 // pred_check_branch
    %552 = sbr.rel (0) target = $region41
  $region40: #{routing_b1_forward.1} parent=0 // pred_region
    _
  $region41: #{routing_b1_forward.1} parent=0 // pred_fallthru
    _
  // Predicated region
  $region42: #{routing_b1_forward.1} parent=0 // pred_check
    _
  $region43: #{routing_b1_forward.1} parent=0 // pred_check_branch
    %554 = sbr.rel (0) target = $region45
  $region44: #{routing_b1_forward.1} parent=0 // pred_region
    _
  $region45: #{routing_b1_forward.1} parent=0 // pred_fallthru
    _

</llo_original>
